<compile_context>
chip_gen: v7x
topology: tpu7x:2x2x1
jax: 0.10.0
libtpu: 0.0.40
codegen_flags: <defaults>
</compile_context>

<pallas_src>
import functools

import jax
import jax.numpy as jnp
from jax.experimental import pallas as pl
from jax.experimental.pallas import tpu as pltpu  # noqa: F401  (CompilerParams when tiling is added)


def _graph_kernel(x_ref, wqk_ref, bqk_ref, gw_ref, gamma_ref, beta_ref,
                  out_ref, *, batch, nodes, feats):
    """Whole-batch single-step kernel.

    x_ref      : (B*N, F)   flattened node features (batch folded into rows)
    wqk_ref    : (F, 2F)    fused [Wq | Wk], stored (in, out) so y = x @ W + b
    bqk_ref    : (1, 2F)    fused [bq | bk]
    gw_ref     : (L, F, F)  stacked GCN weights
    gamma/beta : (L, F)     stacked LayerNorm affine params
    out_ref    : (B, F)     mean over nodes of final features
    """
    bn = batch * nodes
    x2 = x_ref[...]                                            # (B*N, F), f32

    # ---- fused Q/K projection: one (B*N, F) x (F, 2F) MXU matmul -----------
    y = jnp.dot(x2, wqk_ref[...], preferred_element_type=jnp.float32) + bqk_ref[...]
    q3 = y[:, :feats].reshape(batch, nodes, feats)             # (B, N, F)
    k3 = y[:, feats:].reshape(batch, nodes, feats)             # (B, N, F)

    # ---- batched attention scores / adjacency: (B, N, N) -------------------
    s = jnp.einsum('bnf,bmf->bnm', q3, k3,
                   preferred_element_type=jnp.float32)         # (B, N, N)
    sq = s * s
    denom = jnp.maximum(jnp.sum(sq, axis=-1, keepdims=True), 1e-12)  # (B, N, 1)
    # multiply by exact per-row reciprocal (approx recip risks 1e-4 tolerance)
    adj = sq * (1.0 / denom)                                   # (B, N, N)

    # ---- GCN stack: h = relu(LayerNorm(adj @ (h @ W))) ----------------------
    h = x2.reshape(batch, nodes, feats)                        # (B, N, F)
    num_layers = gw_ref.shape[0]
    for l in range(num_layers):            # tiny static L; fori_loop if L grows
        hw = jnp.dot(h.reshape(bn, feats), gw_ref[l],
                     preferred_element_type=jnp.float32)       # batch folded in M
        hw = hw.reshape(batch, nodes, feats)
        h = jnp.einsum('bnm,bmf->bnf', adj, hw,
                       preferred_element_type=jnp.float32)     # batched mix
        # LayerNorm with one elementwise sweep: var = E[h^2] - mu^2.
        mu = jnp.mean(h, axis=-1, keepdims=True)
        msq = jnp.mean(h * h, axis=-1, keepdims=True)
        var = msq - mu * mu
        h = (h - mu) * jax.lax.rsqrt(var + 1e-5)
        h = h * gamma_ref[l][None, None, :] + beta_ref[l][None, None, :]
        h = jnp.maximum(h, 0.0)

    # ---- mean over nodes: sublane (XLU) reduction, no pooling matmul --------
    out_ref[...] = jnp.mean(h, axis=1)                         # (B, F)


@jax.jit
def graph_module(x, wq, bq, wk, bk, gcn_w, ln_gamma, ln_beta):
    B, N, F = x.shape
    x2 = x.reshape(B * N, F)                     # fold batch into M outside kernel
    w_qk = jnp.concatenate([wq, wk], axis=1)     # (F, 2F)
    b_qk = jnp.concatenate([bq, bk], axis=1)     # (1, 2F)
    kernel = functools.partial(_graph_kernel, batch=B, nodes=N, feats=F)
    # TODO(synk): for large B/N, add grid=(B//TB,) with per-batch BlockSpecs,
    # dimension_semantics=("parallel",) (v7x megacore) and an explicit
    # pltpu.CompilerParams(vmem_limit_bytes=...); unnecessary at these shapes.
    return pl.pallas_call(
        kernel,
        out_shape=jax.ShapeDtypeStruct((B, F), jnp.float32),
        # no grid: single fat step, whole arrays resident in VMEM
    )(x2, w_qk, b_qk, gcn_w, ln_gamma, ln_beta)


def reference_jax(x, wq, bq, wk, bk, gcn_w, ln_gamma, ln_beta):
    """Pure-JAX reference mirroring the PyTorch forward."""
    qx = x @ wq + bq                       # (B, N, F)
    kx = x @ wk + bk
    dot_mat = jnp.einsum("bnf,bmf->bnm", qx, kx)
    sq = dot_mat ** 2
    adj = sq / jnp.maximum(jnp.sum(sq, axis=-1, keepdims=True), 1e-12)
    h = x
    for l in range(gcn_w.shape[0]):
        h = h @ gcn_w[l]
        h = jnp.einsum("bnm,bmf->bnf", adj, h)
        mu = jnp.mean(h, axis=-1, keepdims=True)
        var = jnp.mean((h - mu) ** 2, axis=-1, keepdims=True)
        h = (h - mu) * jax.lax.rsqrt(var + 1e-5)
        h = h * ln_gamma[l] + ln_beta[l]
        h = jnp.maximum(h, 0.0)
    return jnp.mean(h, axis=-2)


if __name__ == "__main__":
    # Small shapes: batch=2, nodes=8, features=32, num_layers=2
    B, N, F, L = 2, 8, 32, 2
    key = jax.random.PRNGKey(0)
    kx_, kq, kbq, kk, kbk, kg = jax.random.split(key, 6)

    x = jax.random.normal(kx_, (B, N, F), dtype=jnp.float32)

    # nn.Linear params (stored as (in, out) so y = x @ W + b)
    wq = 0.1 * jax.random.normal(kq, (F, F), dtype=jnp.float32)
    bq = 0.1 * jax.random.normal(kbq, (1, F), dtype=jnp.float32)
    wk = 0.1 * jax.random.normal(kk, (F, F), dtype=jnp.float32)
    bk = 0.1 * jax.random.normal(kbk, (1, F), dtype=jnp.float32)

    # GCN weights: xavier_uniform_, limit = sqrt(6 / (in + out))
    limit = (6.0 / (F + F)) ** 0.5
    gcn_w = jax.random.uniform(kg, (L, F, F), minval=-limit, maxval=limit,
                               dtype=jnp.float32)
    # LayerNorm defaults: weight=1, bias=0
    ln_gamma = jnp.ones((L, F), dtype=jnp.float32)
    ln_beta = jnp.zeros((L, F), dtype=jnp.float32)

    out = graph_module(x, wq, bq, wk, bk, gcn_w, ln_gamma, ln_beta)
    out = jax.block_until_ready(out)

    ref = reference_jax(x, wq, bq[0], wk, bk[0], gcn_w, ln_gamma, ln_beta)
    assert out.shape == (B, F)
    assert jnp.allclose(out, ref, atol=1e-4, rtol=1e-4), "mismatch vs reference"

    print("KERNEL_OK")
</pallas_src>

<mosaic_0001>
module attributes {stable_mosaic.version = 11 : i64} {
  func.func @_graph_kernel(%arg0: memref<16x32xf32, #tpu.memory_space<vmem>>, %arg1: memref<32x64xf32, #tpu.memory_space<vmem>>, %arg2: memref<1x64xf32, #tpu.memory_space<vmem>>, %arg3: memref<2x32x32xf32, #tpu.memory_space<vmem>>, %arg4: memref<2x32xf32, #tpu.memory_space<vmem>>, %arg5: memref<2x32xf32, #tpu.memory_space<vmem>>, %arg6: memref<2x32xf32, #tpu.memory_space<vmem>>) attributes {dimension_semantics = [], scalar_prefetch = 0 : i64, scratch_operands = 0 : i64, tpu.core_type = #tpu.core_type<tc>} {
    %c0 = arith.constant 0 : index
    %c0_0 = arith.constant 0 : index
    %0 = vector.load %arg0[%c0, %c0_0] : memref<16x32xf32, #tpu.memory_space<vmem>>, vector<16x32xf32>
    %c0_1 = arith.constant 0 : index
    %c0_2 = arith.constant 0 : index
    %1 = vector.load %arg1[%c0_1, %c0_2] : memref<32x64xf32, #tpu.memory_space<vmem>>, vector<32x64xf32>
    %cst = arith.constant dense<0.000000e+00> : vector<16x64xf32>
    %2 = tpu.matmul %0, %1, %cst {dimension_numbers = #tpu.dot_dimension_numbers<[1], [0], [0], [1], [0, 0, 1, 1], [], []>} : vector<16x32xf32>, vector<32x64xf32>, vector<16x64xf32> -> vector<16x64xf32>
    %c0_3 = arith.constant 0 : index
    %c0_4 = arith.constant 0 : index
    %3 = vector.load %arg2[%c0_3, %c0_4] : memref<1x64xf32, #tpu.memory_space<vmem>>, vector<1x64xf32>
    %4 = vector.broadcast %3 : vector<1x64xf32> to vector<16x64xf32>
    %5 = arith.addf %2, %4 : vector<16x64xf32>
    %6 = vector.extract_strided_slice %5 {offsets = [0, 0], sizes = [16, 32], strides = [1, 1]} : vector<16x64xf32> to vector<16x32xf32>
    %7 = vector.shape_cast %6 : vector<16x32xf32> to vector<2x8x32xf32>
    %8 = vector.extract_strided_slice %5 {offsets = [0, 32], sizes = [16, 32], strides = [1, 1]} : vector<16x64xf32> to vector<16x32xf32>
    %9 = vector.shape_cast %8 : vector<16x32xf32> to vector<2x8x32xf32>
    "tpu.trace_start"() <{level = 10 : i32, message = "bnf,bmf->bnm"}> : () -> ()
    %cst_5 = arith.constant dense<0.000000e+00> : vector<2x8x8xf32>
    %10 = tpu.matmul %7, %9, %cst_5 {dimension_numbers = #tpu.dot_dimension_numbers<[2], [2], [1], [1], [0, 0, 0, 1, 1, 1], [0], [0]>} : vector<2x8x32xf32>, vector<2x8x32xf32>, vector<2x8x8xf32> -> vector<2x8x8xf32>
    "tpu.trace_stop"() : () -> ()
    %11 = arith.mulf %10, %10 : vector<2x8x8xf32>
    %cst_6 = arith.constant dense<0.000000e+00> : vector<2x8xf32>
    %12 = vector.multi_reduction <add>, %11, %cst_6 [2] : vector<2x8x8xf32> to vector<2x8xf32>
    %13 = vector.shape_cast %12 : vector<2x8xf32> to vector<2x8x1xf32>
    %cst_7 = arith.constant 9.99999996E-13 : f32
    %14 = vector.broadcast %cst_7 : f32 to vector<2x8x1xf32>
    %15 = arith.maximumf %13, %14 : vector<2x8x1xf32>
    %cst_8 = arith.constant 1.000000e+00 : f32
    %16 = vector.broadcast %cst_8 : f32 to vector<2x8x1xf32>
    %17 = arith.divf %16, %15 : vector<2x8x1xf32>
    %18 = vector.broadcast %17 : vector<2x8x1xf32> to vector<2x8x8xf32>
    %19 = arith.mulf %11, %18 : vector<2x8x8xf32>
    %20 = vector.shape_cast %0 : vector<16x32xf32> to vector<2x8x32xf32>
    %21 = vector.shape_cast %20 : vector<2x8x32xf32> to vector<16x32xf32>
    %c0_9 = arith.constant 0 : index
    %c0_10 = arith.constant 0 : index
    %c0_11 = arith.constant 0 : index
    %22 = vector.load %arg3[%c0_9, %c0_10, %c0_11] : memref<2x32x32xf32, #tpu.memory_space<vmem>>, vector<1x32x32xf32>
    %23 = vector.shape_cast %22 : vector<1x32x32xf32> to vector<32x32xf32>
    %cst_12 = arith.constant dense<0.000000e+00> : vector<16x32xf32>
    %24 = tpu.matmul %21, %23, %cst_12 {dimension_numbers = #tpu.dot_dimension_numbers<[1], [0], [0], [1], [0, 0, 1, 1], [], []>} : vector<16x32xf32>, vector<32x32xf32>, vector<16x32xf32> -> vector<16x32xf32>
    %25 = vector.shape_cast %24 : vector<16x32xf32> to vector<2x8x32xf32>
    "tpu.trace_start"() <{level = 10 : i32, message = "bnm,bmf->bnf"}> : () -> ()
    %cst_13 = arith.constant dense<0.000000e+00> : vector<2x8x32xf32>
    %26 = tpu.matmul %19, %25, %cst_13 {dimension_numbers = #tpu.dot_dimension_numbers<[2], [1], [1], [2], [0, 0, 0, 1, 1, 2], [0], [0]>} : vector<2x8x8xf32>, vector<2x8x32xf32>, vector<2x8x32xf32> -> vector<2x8x32xf32>
    "tpu.trace_stop"() : () -> ()
    %cst_14 = arith.constant dense<0.000000e+00> : vector<2x8xf32>
    %27 = vector.multi_reduction <add>, %26, %cst_14 [2] : vector<2x8x32xf32> to vector<2x8xf32>
    %28 = vector.shape_cast %27 : vector<2x8xf32> to vector<2x8x1xf32>
    %cst_15 = arith.constant 3.200000e+01 : f32
    %29 = vector.broadcast %cst_15 : f32 to vector<2x8x1xf32>
    %30 = arith.divf %28, %29 : vector<2x8x1xf32>
    %31 = arith.mulf %26, %26 : vector<2x8x32xf32>
    %cst_16 = arith.constant dense<0.000000e+00> : vector<2x8xf32>
    %32 = vector.multi_reduction <add>, %31, %cst_16 [2] : vector<2x8x32xf32> to vector<2x8xf32>
    %33 = vector.shape_cast %32 : vector<2x8xf32> to vector<2x8x1xf32>
    %cst_17 = arith.constant 3.200000e+01 : f32
    %34 = vector.broadcast %cst_17 : f32 to vector<2x8x1xf32>
    %35 = arith.divf %33, %34 : vector<2x8x1xf32>
    %36 = arith.mulf %30, %30 : vector<2x8x1xf32>
    %37 = arith.subf %35, %36 : vector<2x8x1xf32>
    %38 = vector.broadcast %30 : vector<2x8x1xf32> to vector<2x8x32xf32>
    %39 = arith.subf %26, %38 : vector<2x8x32xf32>
    %cst_18 = arith.constant 9.99999974E-6 : f32
    %40 = vector.broadcast %cst_18 : f32 to vector<2x8x1xf32>
    %41 = arith.addf %37, %40 : vector<2x8x1xf32>
    %42 = math.rsqrt %41 : vector<2x8x1xf32>
    %43 = vector.broadcast %42 : vector<2x8x1xf32> to vector<2x8x32xf32>
    %44 = arith.mulf %39, %43 : vector<2x8x32xf32>
    %c0_19 = arith.constant 0 : index
    %c0_20 = arith.constant 0 : index
    %45 = vector.load %arg4[%c0_19, %c0_20] : memref<2x32xf32, #tpu.memory_space<vmem>>, vector<1x32xf32>
    %46 = vector.shape_cast %45 : vector<1x32xf32> to vector<32xf32>
    %47 = vector.shape_cast %46 : vector<32xf32> to vector<1x1x32xf32>
    %48 = vector.broadcast %47 : vector<1x1x32xf32> to vector<2x8x32xf32>
    %49 = arith.mulf %44, %48 : vector<2x8x32xf32>
    %c0_21 = arith.constant 0 : index
    %c0_22 = arith.constant 0 : index
    %50 = vector.load %arg5[%c0_21, %c0_22] : memref<2x32xf32, #tpu.memory_space<vmem>>, vector<1x32xf32>
    %51 = vector.shape_cast %50 : vector<1x32xf32> to vector<32xf32>
    %52 = vector.shape_cast %51 : vector<32xf32> to vector<1x1x32xf32>
    %53 = vector.broadcast %52 : vector<1x1x32xf32> to vector<2x8x32xf32>
    %54 = arith.addf %49, %53 : vector<2x8x32xf32>
    %cst_23 = arith.constant 0.000000e+00 : f32
    %55 = vector.broadcast %cst_23 : f32 to vector<2x8x32xf32>
    %56 = arith.maximumf %54, %55 : vector<2x8x32xf32>
    %57 = vector.shape_cast %56 : vector<2x8x32xf32> to vector<16x32xf32>
    %c1 = arith.constant 1 : index
    %c0_24 = arith.constant 0 : index
    %c0_25 = arith.constant 0 : index
    %58 = vector.load %arg3[%c1, %c0_24, %c0_25] : memref<2x32x32xf32, #tpu.memory_space<vmem>>, vector<1x32x32xf32>
    %59 = vector.shape_cast %58 : vector<1x32x32xf32> to vector<32x32xf32>
    %cst_26 = arith.constant dense<0.000000e+00> : vector<16x32xf32>
    %60 = tpu.matmul %57, %59, %cst_26 {dimension_numbers = #tpu.dot_dimension_numbers<[1], [0], [0], [1], [0, 0, 1, 1], [], []>} : vector<16x32xf32>, vector<32x32xf32>, vector<16x32xf32> -> vector<16x32xf32>
    %61 = vector.shape_cast %60 : vector<16x32xf32> to vector<2x8x32xf32>
    "tpu.trace_start"() <{level = 10 : i32, message = "bnm,bmf->bnf"}> : () -> ()
    %cst_27 = arith.constant dense<0.000000e+00> : vector<2x8x32xf32>
    %62 = tpu.matmul %19, %61, %cst_27 {dimension_numbers = #tpu.dot_dimension_numbers<[2], [1], [1], [2], [0, 0, 0, 1, 1, 2], [0], [0]>} : vector<2x8x8xf32>, vector<2x8x32xf32>, vector<2x8x32xf32> -> vector<2x8x32xf32>
    "tpu.trace_stop"() : () -> ()
    %cst_28 = arith.constant dense<0.000000e+00> : vector<2x8xf32>
    %63 = vector.multi_reduction <add>, %62, %cst_28 [2] : vector<2x8x32xf32> to vector<2x8xf32>
    %64 = vector.shape_cast %63 : vector<2x8xf32> to vector<2x8x1xf32>
    %cst_29 = arith.constant 3.200000e+01 : f32
    %65 = vector.broadcast %cst_29 : f32 to vector<2x8x1xf32>
    %66 = arith.divf %64, %65 : vector<2x8x1xf32>
    %67 = arith.mulf %62, %62 : vector<2x8x32xf32>
    %cst_30 = arith.constant dense<0.000000e+00> : vector<2x8xf32>
    %68 = vector.multi_reduction <add>, %67, %cst_30 [2] : vector<2x8x32xf32> to vector<2x8xf32>
    %69 = vector.shape_cast %68 : vector<2x8xf32> to vector<2x8x1xf32>
    %cst_31 = arith.constant 3.200000e+01 : f32
    %70 = vector.broadcast %cst_31 : f32 to vector<2x8x1xf32>
    %71 = arith.divf %69, %70 : vector<2x8x1xf32>
    %72 = arith.mulf %66, %66 : vector<2x8x1xf32>
    %73 = arith.subf %71, %72 : vector<2x8x1xf32>
    %74 = vector.broadcast %66 : vector<2x8x1xf32> to vector<2x8x32xf32>
    %75 = arith.subf %62, %74 : vector<2x8x32xf32>
    %cst_32 = arith.constant 9.99999974E-6 : f32
    %76 = vector.broadcast %cst_32 : f32 to vector<2x8x1xf32>
    %77 = arith.addf %73, %76 : vector<2x8x1xf32>
    %78 = math.rsqrt %77 : vector<2x8x1xf32>
    %79 = vector.broadcast %78 : vector<2x8x1xf32> to vector<2x8x32xf32>
    %80 = arith.mulf %75, %79 : vector<2x8x32xf32>
    %c1_33 = arith.constant 1 : index
    %c0_34 = arith.constant 0 : index
    %81 = vector.load %arg4[%c1_33, %c0_34] : memref<2x32xf32, #tpu.memory_space<vmem>>, vector<1x32xf32>
    %82 = vector.shape_cast %81 : vector<1x32xf32> to vector<32xf32>
    %83 = vector.shape_cast %82 : vector<32xf32> to vector<1x1x32xf32>
    %84 = vector.broadcast %83 : vector<1x1x32xf32> to vector<2x8x32xf32>
    %85 = arith.mulf %80, %84 : vector<2x8x32xf32>
    %c1_35 = arith.constant 1 : index
    %c0_36 = arith.constant 0 : index
    %86 = vector.load %arg5[%c1_35, %c0_36] : memref<2x32xf32, #tpu.memory_space<vmem>>, vector<1x32xf32>
    %87 = vector.shape_cast %86 : vector<1x32xf32> to vector<32xf32>
    %88 = vector.shape_cast %87 : vector<32xf32> to vector<1x1x32xf32>
    %89 = vector.broadcast %88 : vector<1x1x32xf32> to vector<2x8x32xf32>
    %90 = arith.addf %85, %89 : vector<2x8x32xf32>
    %cst_37 = arith.constant 0.000000e+00 : f32
    %91 = vector.broadcast %cst_37 : f32 to vector<2x8x32xf32>
    %92 = arith.maximumf %90, %91 : vector<2x8x32xf32>
    %cst_38 = arith.constant dense<0.000000e+00> : vector<2x32xf32>
    %93 = vector.multi_reduction <add>, %92, %cst_38 [1] : vector<2x8x32xf32> to vector<2x32xf32>
    %cst_39 = arith.constant 8.000000e+00 : f32
    %94 = vector.broadcast %cst_39 : f32 to vector<2x32xf32>
    %95 = arith.divf %93, %94 : vector<2x32xf32>
    %c0_40 = arith.constant 0 : index
    %c0_41 = arith.constant 0 : index
    %96 = vector.load %arg6[%c0_40, %c0_41] : memref<2x32xf32, #tpu.memory_space<vmem>>, vector<2x32xf32>
    tpu.vector_store %arg6[%c0_40, %c0_41], %95 {strides = array<i32>} : memref<2x32xf32, #tpu.memory_space<vmem>>, vector<2x32xf32>,
    return
  }
}

</mosaic_0001>

<llo_original>
// kernel: graph_module.1
$region0: #{graph_module.1}
  #allocation0 [shape = 'u32[]', space=smem, size = 0x4, offset = 0x4, fixed_abs, tag = 'smem constant byte address 0x4 - core index']
  #allocation1 [shape = 'u32[144,128]{1,0:T(1,128)}', space=vmem, size = 0x12000, scoped, tag = 'internal scratch']
  %s0 = inlined_call_operand.vmem [shape: f32[16,32], index: 0, kind: input, shape index: {}]
  %s1 = inlined_call_operand.vmem [shape: f32[32,64], index: 1, kind: input, shape index: {}]
  %s2 = inlined_call_operand.vmem [shape: f32[1,64], index: 2, kind: input, shape index: {}]
  %s3 = inlined_call_operand.vmem [shape: f32[2,32,32], index: 3, kind: input, shape index: {}]
  %s4 = inlined_call_operand.vmem [shape: f32[2,32], index: 4, kind: input, shape index: {}]
  %s5 = inlined_call_operand.vmem [shape: f32[2,32], index: 5, kind: input, shape index: {}]
  %s6 = inlined_call_operand.hbm [shape: f32[2,32], index: 6, kind: output, shape index: {}]
  %s7 = sld [smem:[#allocation0]]
  $region34: #{graph_module.1} parent=0
    _
  %s9 = ssub.s32 1, %s7
  %s10 = scalar_select 0, %s9, %s7
  $region1: #{graph_module.1} parent=0
    #allocation2 [shape = 'u8[1024]{0}', space=vmem, size = 0x400, scoped, tag = 'output window, operand 0, single buffered']
    #allocation3 [shape = 's32[1]{0}', space=sflag, size = 0x4, scoped, tag = 'scoped memory for graph_module.1']
    %11 = vsyncpa [#allocation3], 0
    // Predicated region
    $region2: #{graph_module.1} parent=1 // pred_check
      _
    $region3: #{graph_module.1} parent=1 // pred_check_branch
      %13 = sbr.rel (0) target = $region5
    $region4: #{graph_module.1} parent=1 // pred_region
      _
    $region5: #{graph_module.1} parent=1 // pred_fallthru
      _
    // Predicated region
    $region6: #{graph_module.1} parent=1 // pred_check
      _
    $region7: #{graph_module.1} parent=1 // pred_check_branch
      %15 = sbr.rel (0) target = $region9
    $region8: #{graph_module.1} parent=1 // pred_region
      _
    $region9: #{graph_module.1} parent=1 // pred_fallthru
      _
    // Predicated region
    $region10: #{graph_module.1} parent=1 // pred_check
      _
    $region11: #{graph_module.1} parent=1 // pred_check_branch
      %17 = sbr.rel (0) target = $region13
    $region12: #{graph_module.1} parent=1 // pred_region
      _
    $region13: #{graph_module.1} parent=1 // pred_fallthru
      _
    // Predicated region
    $region14: #{graph_module.1} parent=1 // pred_check
      _
    $region15: #{graph_module.1} parent=1 // pred_check_branch
      %19 = sbr.rel (0) target = $region17
    $region16: #{graph_module.1} parent=1 // pred_region
      _
    $region17: #{graph_module.1} parent=1 // pred_fallthru
      _
    // Predicated region
    $region18: #{graph_module.1} parent=1 // pred_check
      _
    $region19: #{graph_module.1} parent=1 // pred_check_branch
      %21 = sbr.rel (0) target = $region21
    $region20: #{graph_module.1} parent=1 // pred_region
      _
    $region21: #{graph_module.1} parent=1 // pred_fallthru
      _
    // Predicated region
    $region22: #{graph_module.1} parent=1 // pred_check
      _
    $region23: #{graph_module.1} parent=1 // pred_check_branch
      %23 = sbr.rel (0) target = $region25
    $region24: #{graph_module.1} parent=1 // pred_region
      _
    $region25: #{graph_module.1} parent=1 // pred_fallthru
      _
    %v24 = vld [vmem:[%s0] sm:$0xff]
    %v25 = vld [vmem:[%s0 + $0x8] sm:$0xff]
    %v26 = vld [vmem:[%s1] sm:$0xff]
    %v27 = vld [vmem:[%s1 + $0x8] sm:$0xff]
    %v28 = vld [vmem:[%s1 + $0x10] sm:$0xff]
    %v29 = vld [vmem:[%s1 + $0x18] sm:$0xff]
    %v30 = vld [vmem:[%s2] sm:$0x1]
    %v32 = vlaneseq
    %v33 = vshrl.u32 %v32, 7
    %v34 = vsub.s32 0, %v33
    %v35 = vrot.slane %v30, %v34
    %vm37 = vcmask 261120
    %v39 = vsel %vm37, %v24, 0
    %v42 = vsel %vm37, %v25, 0
    %44 = vmatprep.subr.mxu0 0.0
    %45 = vmatpush1.msra.mxu0 %v26
    %46 = vmatprep.subr.mxu0 0.0
    %47 = vmatpush1.msra.mxu0 %v27
    %48 = vmatprep.subr.mxu0 0.0
    %49 = vmatpush1.msra.mxu0 %v28
    %50 = vmatprep.subr.mxu0 0.0
    %51 = vmatpush1.msra.mxu0 %v29
    %52 = vmatprep.subr.mxu0 0.0
    %53 = vmatpush1.msra.mxu0 0.0
    %54 = vmatprep.subr.mxu0 0.0
    %55 = vmatpush1.msra.mxu0 0.0
    %56 = vmatprep.subr.mxu0 0.0
    %57 = vmatpush1.msra.mxu0 0.0
    %58 = vmatprep.subr.mxu0 0.0
    %59 = vmatpush1.msra.mxu0 0.0
    %60 = vmatprep.subr.mxu0 0.0
    %61 = vmatpush1.msra.mxu0 0.0
    %62 = vmatprep.subr.mxu0 0.0
    %63 = vmatpush1.msra.mxu0 0.0
    %64 = vmatprep.subr.mxu0 0.0
    %65 = vmatpush1.msra.mxu0 0.0
    %66 = vmatprep.subr.mxu0 0.0
    %67 = vmatpush1.msra.mxu0 0.0
    %68 = vmatprep.subr.mxu0 0.0
    %69 = vmatpush1.msra.mxu0 0.0
    %70 = vmatprep.subr.mxu0 0.0
    %71 = vmatpush1.msra.mxu0 0.0
    %72 = vmatprep.subr.mxu0 0.0
    %73 = vmatpush1.msra.mxu0 0.0
    %74 = vmatprep.subr.mxu0 0.0
    %75 = vmatpush1.msra.mxu0 0.0
    %76 = vmatprep.subr.mxu0 0.0
    %77 = vmatpush1.msra.mxu0 0.0
    %78 = vmatprep.subr.mxu0 0.0
    %79 = vmatpush1.msra.mxu0 0.0
    %80 = vmatprep.subr.mxu0 0.0
    %81 = vmatpush1.msra.mxu0 0.0
    %82 = vmatprep.subr.mxu0 0.0
    %83 = vmatpush1.msra.mxu0 0.0
    %84 = vmatprep.subr.mxu0 0.0
    %85 = vmatpush1.msra.mxu0 0.0
    %86 = vmatprep.subr.mxu0 0.0
    %87 = vmatpush1.msra.mxu0 0.0
    %88 = vmatprep.subr.mxu0 0.0
    %89 = vmatpush1.msra.mxu0 0.0
    %90 = vmatprep.subr.mxu0 0.0
    %91 = vmatpush1.msra.mxu0 0.0
    %92 = vmatprep.subr.mxu0 0.0
    %93 = vmatpush1.msra.mxu0 0.0
    %94 = vmatprep.subr.mxu0 0.0
    %95 = vmatpush1.msra.mxu0 0.0
    %96 = vmatprep.subr.mxu0 0.0
    %97 = vmatpush1.msra.mxu0 0.0
    %98 = vmatprep.subr.mxu0 0.0
    %99 = vmatpush1.msra.mxu0 0.0
    %100 = vmatprep.subr.mxu0 0.0
    %101 = vmatpush1.msra.mxu0 0.0
    %102 = vmatprep.subr.mxu0 0.0
    %103 = vmatpush1.msra.mxu0 0.0
    %104 = vmatprep.subr.mxu0 0.0
    %105 = vmatpush1.msra.mxu0 0.0
    %106 = vmatprep.subr.mxu0 0.0
    %107 = vmatpush1.msra.mxu0 0.0
    %108 = vmatprep.mubr.f32.mxu0 0.0
    %109 = vmatmul.mubr.f32.gmra.mrb[0].mxu0 %v39
    %v110 = vpop.f32.mrb[0].mxu0
    %v111 = vadd.f32 %v35, %v110
    %v112 = vpop.f32.mrb[0].mxu0
    %113 = vmatprep.mubr.f32.mxu0 0.0
    %114 = vmatmul.mubr.f32.gmra.mrb[0].mxu0 %v42
    %v115 = vpop.f32.mrb[0].mxu0
    %v116 = vadd.f32 %v35, %v115
    %v117 = vpop.f32.mrb[0].mxu0
    %118 = vdwg.mxu0
    %120 = vrot.lane.b32.xlu0 %v111, 96
    %v121 = vpop.permute.xlu0 %120
    %v122 = vsel %vm37, %v111, 0
    %v124 = vsel %vm37, %v121, 0
    %126 = vmatprep.subr.mxu0 0.0
    %127 = vmatpush1.xpose.msra.mxu0 %v124
    %128 = vmatprep.subr.mxu0 0.0
    %129 = vmatpush1.xpose.msra.mxu0 0.0
    %130 = vmatprep.subr.mxu0 0.0
    %131 = vmatpush1.xpose.msra.mxu0 0.0
    %132 = vmatprep.subr.mxu0 0.0
    %133 = vmatpush1.xpose.msra.mxu0 0.0
    %134 = vmatprep.subr.mxu0 0.0
    %135 = vmatpush1.xpose.msra.mxu0 0.0
    %136 = vmatprep.subr.mxu0 0.0
    %137 = vmatpush1.xpose.msra.mxu0 0.0
    %138 = vmatprep.subr.mxu0 0.0
    %139 = vmatpush1.xpose.msra.mxu0 0.0
    %140 = vmatprep.subr.mxu0 0.0
    %141 = vmatpush1.xpose.msra.mxu0 0.0
    %142 = vmatprep.subr.mxu0 0.0
    %143 = vmatpush1.xpose.msra.mxu0 0.0
    %144 = vmatprep.subr.mxu0 0.0
    %145 = vmatpush1.xpose.msra.mxu0 0.0
    %146 = vmatprep.subr.mxu0 0.0
    %147 = vmatpush1.xpose.msra.mxu0 0.0
    %148 = vmatprep.subr.mxu0 0.0
    %149 = vmatpush1.xpose.msra.mxu0 0.0
    %150 = vmatprep.subr.mxu0 0.0
    %151 = vmatpush1.xpose.msra.mxu0 0.0
    %152 = vmatprep.subr.mxu0 0.0
    %153 = vmatpush1.xpose.msra.mxu0 0.0
    %154 = vmatprep.subr.mxu0 0.0
    %155 = vmatpush1.xpose.msra.mxu0 0.0
    %156 = vmatprep.subr.mxu0 0.0
    %157 = vmatpush1.xpose.msra.mxu0 0.0
    %158 = vmatprep.subr.mxu0 0.0
    %159 = vmatpush1.xpose.msra.mxu0 0.0
    %160 = vmatprep.subr.mxu0 0.0
    %161 = vmatpush1.xpose.msra.mxu0 0.0
    %162 = vmatprep.subr.mxu0 0.0
    %163 = vmatpush1.xpose.msra.mxu0 0.0
    %164 = vmatprep.subr.mxu0 0.0
    %165 = vmatpush1.xpose.msra.mxu0 0.0
    %166 = vmatprep.subr.mxu0 0.0
    %167 = vmatpush1.xpose.msra.mxu0 0.0
    %168 = vmatprep.subr.mxu0 0.0
    %169 = vmatpush1.xpose.msra.mxu0 0.0
    %170 = vmatprep.subr.mxu0 0.0
    %171 = vmatpush1.xpose.msra.mxu0 0.0
    %172 = vmatprep.subr.mxu0 0.0
    %173 = vmatpush1.xpose.msra.mxu0 0.0
    %174 = vmatprep.subr.mxu0 0.0
    %175 = vmatpush1.xpose.msra.mxu0 0.0
    %176 = vmatprep.subr.mxu0 0.0
    %177 = vmatpush1.xpose.msra.mxu0 0.0
    %178 = vmatprep.subr.mxu0 0.0
    %179 = vmatpush1.xpose.msra.mxu0 0.0
    %180 = vmatprep.subr.mxu0 0.0
    %181 = vmatpush1.xpose.msra.mxu0 0.0
    %182 = vmatprep.subr.mxu0 0.0
    %183 = vmatpush1.xpose.msra.mxu0 0.0
    %184 = vmatprep.subr.mxu0 0.0
    %185 = vmatpush1.xpose.msra.mxu0 0.0
    %186 = vmatprep.subr.mxu0 0.0
    %187 = vmatpush1.xpose.msra.mxu0 0.0
    %188 = vmatprep.subr.mxu0 0.0
    %189 = vmatpush1.xpose.msra.mxu0 0.0
    %190 = vmatprep.mubr.f32.mxu0 0.0
    %191 = vmatmul.mubr.f32.gmra.mrb[0].mxu0 %v122
    %v192 = vpop.f32.mrb[0].mxu0
    %v193 = vadd.f32 0.0, %v192
    %v194 = vpop.f32.mrb[0].mxu0
    %195 = vdwg.mxu0
    %197 = vrot.lane.b32.xlu0 %v116, 96
    %v198 = vpop.permute.xlu0 %197
    %v199 = vsel %vm37, %v116, 0
    %v201 = vsel %vm37, %v198, 0
    %203 = vmatprep.subr.mxu0 0.0
    %204 = vmatpush1.xpose.msra.mxu0 %v201
    %205 = vmatprep.subr.mxu0 0.0
    %206 = vmatpush1.xpose.msra.mxu0 0.0
    %207 = vmatprep.subr.mxu0 0.0
    %208 = vmatpush1.xpose.msra.mxu0 0.0
    %209 = vmatprep.subr.mxu0 0.0
    %210 = vmatpush1.xpose.msra.mxu0 0.0
    %211 = vmatprep.subr.mxu0 0.0
    %212 = vmatpush1.xpose.msra.mxu0 0.0
    %213 = vmatprep.subr.mxu0 0.0
    %214 = vmatpush1.xpose.msra.mxu0 0.0
    %215 = vmatprep.subr.mxu0 0.0
    %216 = vmatpush1.xpose.msra.mxu0 0.0
    %217 = vmatprep.subr.mxu0 0.0
    %218 = vmatpush1.xpose.msra.mxu0 0.0
    %219 = vmatprep.subr.mxu0 0.0
    %220 = vmatpush1.xpose.msra.mxu0 0.0
    %221 = vmatprep.subr.mxu0 0.0
    %222 = vmatpush1.xpose.msra.mxu0 0.0
    %223 = vmatprep.subr.mxu0 0.0
    %224 = vmatpush1.xpose.msra.mxu0 0.0
    %225 = vmatprep.subr.mxu0 0.0
    %226 = vmatpush1.xpose.msra.mxu0 0.0
    %227 = vmatprep.subr.mxu0 0.0
    %228 = vmatpush1.xpose.msra.mxu0 0.0
    %229 = vmatprep.subr.mxu0 0.0
    %230 = vmatpush1.xpose.msra.mxu0 0.0
    %231 = vmatprep.subr.mxu0 0.0
    %232 = vmatpush1.xpose.msra.mxu0 0.0
    %233 = vmatprep.subr.mxu0 0.0
    %234 = vmatpush1.xpose.msra.mxu0 0.0
    %235 = vmatprep.subr.mxu0 0.0
    %236 = vmatpush1.xpose.msra.mxu0 0.0
    %237 = vmatprep.subr.mxu0 0.0
    %238 = vmatpush1.xpose.msra.mxu0 0.0
    %239 = vmatprep.subr.mxu0 0.0
    %240 = vmatpush1.xpose.msra.mxu0 0.0
    %241 = vmatprep.subr.mxu0 0.0
    %242 = vmatpush1.xpose.msra.mxu0 0.0
    %243 = vmatprep.subr.mxu0 0.0
    %244 = vmatpush1.xpose.msra.mxu0 0.0
    %245 = vmatprep.subr.mxu0 0.0
    %246 = vmatpush1.xpose.msra.mxu0 0.0
    %247 = vmatprep.subr.mxu0 0.0
    %248 = vmatpush1.xpose.msra.mxu0 0.0
    %249 = vmatprep.subr.mxu0 0.0
    %250 = vmatpush1.xpose.msra.mxu0 0.0
    %251 = vmatprep.subr.mxu0 0.0
    %252 = vmatpush1.xpose.msra.mxu0 0.0
    %253 = vmatprep.subr.mxu0 0.0
    %254 = vmatpush1.xpose.msra.mxu0 0.0
    %255 = vmatprep.subr.mxu0 0.0
    %256 = vmatpush1.xpose.msra.mxu0 0.0
    %257 = vmatprep.subr.mxu0 0.0
    %258 = vmatpush1.xpose.msra.mxu0 0.0
    %259 = vmatprep.subr.mxu0 0.0
    %260 = vmatpush1.xpose.msra.mxu0 0.0
    %261 = vmatprep.subr.mxu0 0.0
    %262 = vmatpush1.xpose.msra.mxu0 0.0
    %263 = vmatprep.subr.mxu0 0.0
    %264 = vmatpush1.xpose.msra.mxu0 0.0
    %265 = vmatprep.subr.mxu0 0.0
    %266 = vmatpush1.xpose.msra.mxu0 0.0
    %267 = vmatprep.mubr.f32.mxu0 0.0
    %268 = vmatmul.mubr.f32.gmra.mrb[0].mxu0 %v199
    %v269 = vpop.f32.mrb[0].mxu0
    %v270 = vadd.f32 0.0, %v269
    %v271 = vpop.f32.mrb[0].mxu0
    %272 = vdwg.mxu0
    %v273 = vmul.f32 %v193, %v193
    %v274 = vmul.f32 %v270, %v270
    %vm275 = vcmask 64512
    %v276 = vsel %vm275, %v273, 0.0
    %277 = vadd.xlane.f32.xlu0 %v276
    %v278 = vpop.xlane.xlu0 %277
    %v279 = vsel %vm275, %v274, 0.0
    %280 = vadd.xlane.f32.xlu0 %v279
    %v281 = vpop.xlane.xlu0 %280
    %v282 = vmax.f32 %v278, 1e-12
    %v283 = vmax.f32 %v281, 1e-12
    %v284 = vrcp.pop %v282
    %v285 = vmul.f32 1.0, %v284
    %v286 = vrcp.pop %v283
    %v287 = vmul.f32 1.0, %v286
    %v288 = vmul.f32 %v273, %v285
    %v289 = vmul.f32 %v274, %v287
    %v290 = vld [vmem:[%s3] sm:$0xff]
    %v291 = vld [vmem:[%s3 + $0x8] sm:$0xff]
    %v292 = vld [vmem:[%s3 + $0x10] sm:$0xff]
    %v293 = vld [vmem:[%s3 + $0x18] sm:$0xff]
    %294 = vmatprep.subr.mxu0 0.0
    %295 = vmatpush1.msra.mxu0 %v290
    %296 = vmatprep.subr.mxu0 0.0
    %297 = vmatpush1.msra.mxu0 %v291
    %298 = vmatprep.subr.mxu0 0.0
    %299 = vmatpush1.msra.mxu0 %v292
    %300 = vmatprep.subr.mxu0 0.0
    %301 = vmatpush1.msra.mxu0 %v293
    %302 = vmatprep.subr.mxu0 0.0
    %303 = vmatpush1.msra.mxu0 0.0
    %304 = vmatprep.subr.mxu0 0.0
    %305 = vmatpush1.msra.mxu0 0.0
    %306 = vmatprep.subr.mxu0 0.0
    %307 = vmatpush1.msra.mxu0 0.0
    %308 = vmatprep.subr.mxu0 0.0
    %309 = vmatpush1.msra.mxu0 0.0
    %310 = vmatprep.subr.mxu0 0.0
    %311 = vmatpush1.msra.mxu0 0.0
    %312 = vmatprep.subr.mxu0 0.0
    %313 = vmatpush1.msra.mxu0 0.0
    %314 = vmatprep.subr.mxu0 0.0
    %315 = vmatpush1.msra.mxu0 0.0
    %316 = vmatprep.subr.mxu0 0.0
    %317 = vmatpush1.msra.mxu0 0.0
    %318 = vmatprep.subr.mxu0 0.0
    %319 = vmatpush1.msra.mxu0 0.0
    %320 = vmatprep.subr.mxu0 0.0
    %321 = vmatpush1.msra.mxu0 0.0
    %322 = vmatprep.subr.mxu0 0.0
    %323 = vmatpush1.msra.mxu0 0.0
    %324 = vmatprep.subr.mxu0 0.0
    %325 = vmatpush1.msra.mxu0 0.0
    %326 = vmatprep.subr.mxu0 0.0
    %327 = vmatpush1.msra.mxu0 0.0
    %328 = vmatprep.subr.mxu0 0.0
    %329 = vmatpush1.msra.mxu0 0.0
    %330 = vmatprep.subr.mxu0 0.0
    %331 = vmatpush1.msra.mxu0 0.0
    %332 = vmatprep.subr.mxu0 0.0
    %333 = vmatpush1.msra.mxu0 0.0
    %334 = vmatprep.subr.mxu0 0.0
    %335 = vmatpush1.msra.mxu0 0.0
    %336 = vmatprep.subr.mxu0 0.0
    %337 = vmatpush1.msra.mxu0 0.0
    %338 = vmatprep.subr.mxu0 0.0
    %339 = vmatpush1.msra.mxu0 0.0
    %340 = vmatprep.subr.mxu0 0.0
    %341 = vmatpush1.msra.mxu0 0.0
    %342 = vmatprep.subr.mxu0 0.0
    %343 = vmatpush1.msra.mxu0 0.0
    %344 = vmatprep.subr.mxu0 0.0
    %345 = vmatpush1.msra.mxu0 0.0
    %346 = vmatprep.subr.mxu0 0.0
    %347 = vmatpush1.msra.mxu0 0.0
    %348 = vmatprep.subr.mxu0 0.0
    %349 = vmatpush1.msra.mxu0 0.0
    %350 = vmatprep.subr.mxu0 0.0
    %351 = vmatpush1.msra.mxu0 0.0
    %352 = vmatprep.subr.mxu0 0.0
    %353 = vmatpush1.msra.mxu0 0.0
    %354 = vmatprep.subr.mxu0 0.0
    %355 = vmatpush1.msra.mxu0 0.0
    %356 = vmatprep.subr.mxu0 0.0
    %357 = vmatpush1.msra.mxu0 0.0
    %358 = vmatprep.mubr.f32.mxu0 0.0
    %359 = vmatmul.mubr.f32.gmra.mrb[0].mxu0 %v39
    %v360 = vpop.f32.mrb[0].mxu0
    %v361 = vadd.f32 0.0, %v360
    %v362 = vpop.f32.mrb[0].mxu0
    %363 = vmatprep.mubr.f32.mxu0 0.0
    %364 = vmatmul.mubr.f32.gmra.mrb[0].mxu0 %v42
    %v365 = vpop.f32.mrb[0].mxu0
    %v366 = vadd.f32 0.0, %v365
    %v367 = vpop.f32.mrb[0].mxu0
    %368 = vdwg.mxu0
    %v370 = vsel %vm275, %v288, 0
    %372 = vmatprep.subr.mxu0 0.0
    %373 = vmatpush1.msra.mxu0 %v361
    %374 = vmatprep.subr.mxu0 0.0
    %375 = vmatpush1.msra.mxu0 0.0
    %376 = vmatprep.subr.mxu0 0.0
    %377 = vmatpush1.msra.mxu0 0.0
    %378 = vmatprep.subr.mxu0 0.0
    %379 = vmatpush1.msra.mxu0 0.0
    %380 = vmatprep.subr.mxu0 0.0
    %381 = vmatpush1.msra.mxu0 0.0
    %382 = vmatprep.subr.mxu0 0.0
    %383 = vmatpush1.msra.mxu0 0.0
    %384 = vmatprep.subr.mxu0 0.0
    %385 = vmatpush1.msra.mxu0 0.0
    %386 = vmatprep.subr.mxu0 0.0
    %387 = vmatpush1.msra.mxu0 0.0
    %388 = vmatprep.subr.mxu0 0.0
    %389 = vmatpush1.msra.mxu0 0.0
    %390 = vmatprep.subr.mxu0 0.0
    %391 = vmatpush1.msra.mxu0 0.0
    %392 = vmatprep.subr.mxu0 0.0
    %393 = vmatpush1.msra.mxu0 0.0
    %394 = vmatprep.subr.mxu0 0.0
    %395 = vmatpush1.msra.mxu0 0.0
    %396 = vmatprep.subr.mxu0 0.0
    %397 = vmatpush1.msra.mxu0 0.0
    %398 = vmatprep.subr.mxu0 0.0
    %399 = vmatpush1.msra.mxu0 0.0
    %400 = vmatprep.subr.mxu0 0.0
    %401 = vmatpush1.msra.mxu0 0.0
    %402 = vmatprep.subr.mxu0 0.0
    %403 = vmatpush1.msra.mxu0 0.0
    %404 = vmatprep.subr.mxu0 0.0
    %405 = vmatpush1.msra.mxu0 0.0
    %406 = vmatprep.subr.mxu0 0.0
    %407 = vmatpush1.msra.mxu0 0.0
    %408 = vmatprep.subr.mxu0 0.0
    %409 = vmatpush1.msra.mxu0 0.0
    %410 = vmatprep.subr.mxu0 0.0
    %411 = vmatpush1.msra.mxu0 0.0
    %412 = vmatprep.subr.mxu0 0.0
    %413 = vmatpush1.msra.mxu0 0.0
    %414 = vmatprep.subr.mxu0 0.0
    %415 = vmatpush1.msra.mxu0 0.0
    %416 = vmatprep.subr.mxu0 0.0
    %417 = vmatpush1.msra.mxu0 0.0
    %418 = vmatprep.subr.mxu0 0.0
    %419 = vmatpush1.msra.mxu0 0.0
    %420 = vmatprep.subr.mxu0 0.0
    %421 = vmatpush1.msra.mxu0 0.0
    %422 = vmatprep.subr.mxu0 0.0
    %423 = vmatpush1.msra.mxu0 0.0
    %424 = vmatprep.subr.mxu0 0.0
    %425 = vmatpush1.msra.mxu0 0.0
    %426 = vmatprep.subr.mxu0 0.0
    %427 = vmatpush1.msra.mxu0 0.0
    %428 = vmatprep.subr.mxu0 0.0
    %429 = vmatpush1.msra.mxu0 0.0
    %430 = vmatprep.subr.mxu0 0.0
    %431 = vmatpush1.msra.mxu0 0.0
    %432 = vmatprep.subr.mxu0 0.0
    %433 = vmatpush1.msra.mxu0 0.0
    %434 = vmatprep.subr.mxu0 0.0
    %435 = vmatpush1.msra.mxu0 0.0
    %436 = vmatprep.mubr.f32.mxu0 0.0
    %437 = vmatmul.mubr.f32.gmra.mrb[0].mxu0 %v370
    %v438 = vpop.f32.mrb[0].mxu0
    %v439 = vadd.f32 0.0, %v438
    %v440 = vpop.f32.mrb[0].mxu0
    %441 = vdwg.mxu0
    %v443 = vsel %vm275, %v289, 0
    %445 = vmatprep.subr.mxu0 0.0
    %446 = vmatpush1.msra.mxu0 %v366
    %447 = vmatprep.subr.mxu0 0.0
    %448 = vmatpush1.msra.mxu0 0.0
    %449 = vmatprep.subr.mxu0 0.0
    %450 = vmatpush1.msra.mxu0 0.0
    %451 = vmatprep.subr.mxu0 0.0
    %452 = vmatpush1.msra.mxu0 0.0
    %453 = vmatprep.subr.mxu0 0.0
    %454 = vmatpush1.msra.mxu0 0.0
    %455 = vmatprep.subr.mxu0 0.0
    %456 = vmatpush1.msra.mxu0 0.0
    %457 = vmatprep.subr.mxu0 0.0
    %458 = vmatpush1.msra.mxu0 0.0
    %459 = vmatprep.subr.mxu0 0.0
    %460 = vmatpush1.msra.mxu0 0.0
    %461 = vmatprep.subr.mxu0 0.0
    %462 = vmatpush1.msra.mxu0 0.0
    %463 = vmatprep.subr.mxu0 0.0
    %464 = vmatpush1.msra.mxu0 0.0
    %465 = vmatprep.subr.mxu0 0.0
    %466 = vmatpush1.msra.mxu0 0.0
    %467 = vmatprep.subr.mxu0 0.0
    %468 = vmatpush1.msra.mxu0 0.0
    %469 = vmatprep.subr.mxu0 0.0
    %470 = vmatpush1.msra.mxu0 0.0
    %471 = vmatprep.subr.mxu0 0.0
    %472 = vmatpush1.msra.mxu0 0.0
    %473 = vmatprep.subr.mxu0 0.0
    %474 = vmatpush1.msra.mxu0 0.0
    %475 = vmatprep.subr.mxu0 0.0
    %476 = vmatpush1.msra.mxu0 0.0
    %477 = vmatprep.subr.mxu0 0.0
    %478 = vmatpush1.msra.mxu0 0.0
    %479 = vmatprep.subr.mxu0 0.0
    %480 = vmatpush1.msra.mxu0 0.0
    %481 = vmatprep.subr.mxu0 0.0
    %482 = vmatpush1.msra.mxu0 0.0
    %483 = vmatprep.subr.mxu0 0.0
    %484 = vmatpush1.msra.mxu0 0.0
    %485 = vmatprep.subr.mxu0 0.0
    %486 = vmatpush1.msra.mxu0 0.0
    %487 = vmatprep.subr.mxu0 0.0
    %488 = vmatpush1.msra.mxu0 0.0
    %489 = vmatprep.subr.mxu0 0.0
    %490 = vmatpush1.msra.mxu0 0.0
    %491 = vmatprep.subr.mxu0 0.0
    %492 = vmatpush1.msra.mxu0 0.0
    %493 = vmatprep.subr.mxu0 0.0
    %494 = vmatpush1.msra.mxu0 0.0
    %495 = vmatprep.subr.mxu0 0.0
    %496 = vmatpush1.msra.mxu0 0.0
    %497 = vmatprep.subr.mxu0 0.0
    %498 = vmatpush1.msra.mxu0 0.0
    %499 = vmatprep.subr.mxu0 0.0
    %500 = vmatpush1.msra.mxu0 0.0
    %501 = vmatprep.subr.mxu0 0.0
    %502 = vmatpush1.msra.mxu0 0.0
    %503 = vmatprep.subr.mxu0 0.0
    %504 = vmatpush1.msra.mxu0 0.0
    %505 = vmatprep.subr.mxu0 0.0
    %506 = vmatpush1.msra.mxu0 0.0
    %507 = vmatprep.subr.mxu0 0.0
    %508 = vmatpush1.msra.mxu0 0.0
    %509 = vmatprep.mubr.f32.mxu0 0.0
    %510 = vmatmul.mubr.f32.gmra.mrb[0].mxu0 %v443
    %v511 = vpop.f32.mrb[0].mxu0
    %v512 = vadd.f32 0.0, %v511
    %v513 = vpop.f32.mrb[0].mxu0
    %514 = vdwg.mxu0
    %v515 = vsel %vm37, %v439, 0.0
    %516 = vadd.xlane.f32.xlu0 %v515
    %v517 = vpop.xlane.xlu0 %516
    %v518 = vsel %vm37, %v512, 0.0
    %519 = vadd.xlane.f32.xlu0 %v518
    %v520 = vpop.xlane.xlu0 %519
    %v521 = vrcp.pop 32.0
    %v522 = vmul.f32 %v517, %v521
    %v523 = vmul.f32 %v520, %v521
    %v524 = vmul.f32 %v439, %v439
    %v525 = vmul.f32 %v512, %v512
    %v526 = vsel %vm37, %v524, 0.0
    %527 = vadd.xlane.f32.xlu0 %v526
    %v528 = vpop.xlane.xlu0 %527
    %v529 = vsel %vm37, %v525, 0.0
    %530 = vadd.xlane.f32.xlu0 %v529
    %v531 = vpop.xlane.xlu0 %530
    %v532 = vmul.f32 %v528, %v521
    %v533 = vmul.f32 %v531, %v521
    %v534 = vmul.f32 %v522, %v522
    %v535 = vmul.f32 %v523, %v523
    %v536 = vsub.f32 %v532, %v534
    %v537 = vsub.f32 %v533, %v535
    %v538 = vsub.f32 %v439, %v522
    %v539 = vsub.f32 %v512, %v523
    %v540 = vadd.f32 %v536, 1e-05
    %v541 = vadd.f32 %v537, 1e-05
    %v542 = vrsqrt.pop %v540
    %v543 = vrsqrt.pop %v541
    %v544 = vmul.f32 %v538, %v542
    %v545 = vmul.f32 %v539, %v543
    %v546 = vld [vmem:[%s4] sm:$0x1]
    %v547 = vlaneseq
    %v548 = vshrl.u32 %v547, 7
    %v549 = vsub.s32 0, %v548
    %v550 = vrot.slane %v546, %v549
    %v551 = vmul.f32 %v544, %v550
    %v552 = vmul.f32 %v545, %v550
    %v553 = vld [vmem:[%s5] sm:$0x1]
    %v554 = vlaneseq
    %v555 = vshrl.u32 %v554, 7
    %v556 = vsub.s32 0, %v555
    %v557 = vrot.slane %v553, %v556
    %v558 = vadd.f32 %v551, %v557
    %v559 = vadd.f32 %v552, %v557
    %v560 = vmax.f32 %v558, 0.0
    %v561 = vmax.f32 %v559, 0.0
    %s562 = scalar_lea.vmem %s3, 32
    %v563 = vld [vmem:[%s562] sm:$0xff]
    %v564 = vld [vmem:[%s562 + $0x8] sm:$0xff]
    %v565 = vld [vmem:[%s562 + $0x10] sm:$0xff]
    %v566 = vld [vmem:[%s562 + $0x18] sm:$0xff]
    %v568 = vsel %vm37, %v560, 0
    %v571 = vsel %vm37, %v561, 0
    %573 = vmatprep.subr.mxu0 0.0
    %574 = vmatpush1.msra.mxu0 %v563
    %575 = vmatprep.subr.mxu0 0.0
    %576 = vmatpush1.msra.mxu0 %v564
    %577 = vmatprep.subr.mxu0 0.0
    %578 = vmatpush1.msra.mxu0 %v565
    %579 = vmatprep.subr.mxu0 0.0
    %580 = vmatpush1.msra.mxu0 %v566
    %581 = vmatprep.subr.mxu0 0.0
    %582 = vmatpush1.msra.mxu0 0.0
    %583 = vmatprep.subr.mxu0 0.0
    %584 = vmatpush1.msra.mxu0 0.0
    %585 = vmatprep.subr.mxu0 0.0
    %586 = vmatpush1.msra.mxu0 0.0
    %587 = vmatprep.subr.mxu0 0.0
    %588 = vmatpush1.msra.mxu0 0.0
    %589 = vmatprep.subr.mxu0 0.0
    %590 = vmatpush1.msra.mxu0 0.0
    %591 = vmatprep.subr.mxu0 0.0
    %592 = vmatpush1.msra.mxu0 0.0
    %593 = vmatprep.subr.mxu0 0.0
    %594 = vmatpush1.msra.mxu0 0.0
    %595 = vmatprep.subr.mxu0 0.0
    %596 = vmatpush1.msra.mxu0 0.0
    %597 = vmatprep.subr.mxu0 0.0
    %598 = vmatpush1.msra.mxu0 0.0
    %599 = vmatprep.subr.mxu0 0.0
    %600 = vmatpush1.msra.mxu0 0.0
    %601 = vmatprep.subr.mxu0 0.0
    %602 = vmatpush1.msra.mxu0 0.0
    %603 = vmatprep.subr.mxu0 0.0
    %604 = vmatpush1.msra.mxu0 0.0
    %605 = vmatprep.subr.mxu0 0.0
    %606 = vmatpush1.msra.mxu0 0.0
    %607 = vmatprep.subr.mxu0 0.0
    %608 = vmatpush1.msra.mxu0 0.0
    %609 = vmatprep.subr.mxu0 0.0
    %610 = vmatpush1.msra.mxu0 0.0
    %611 = vmatprep.subr.mxu0 0.0
    %612 = vmatpush1.msra.mxu0 0.0
    %613 = vmatprep.subr.mxu0 0.0
    %614 = vmatpush1.msra.mxu0 0.0
    %615 = vmatprep.subr.mxu0 0.0
    %616 = vmatpush1.msra.mxu0 0.0
    %617 = vmatprep.subr.mxu0 0.0
    %618 = vmatpush1.msra.mxu0 0.0
    %619 = vmatprep.subr.mxu0 0.0
    %620 = vmatpush1.msra.mxu0 0.0
    %621 = vmatprep.subr.mxu0 0.0
    %622 = vmatpush1.msra.mxu0 0.0
    %623 = vmatprep.subr.mxu0 0.0
    %624 = vmatpush1.msra.mxu0 0.0
    %625 = vmatprep.subr.mxu0 0.0
    %626 = vmatpush1.msra.mxu0 0.0
    %627 = vmatprep.subr.mxu0 0.0
    %628 = vmatpush1.msra.mxu0 0.0
    %629 = vmatprep.subr.mxu0 0.0
    %630 = vmatpush1.msra.mxu0 0.0
    %631 = vmatprep.subr.mxu0 0.0
    %632 = vmatpush1.msra.mxu0 0.0
    %633 = vmatprep.subr.mxu0 0.0
    %634 = vmatpush1.msra.mxu0 0.0
    %635 = vmatprep.subr.mxu0 0.0
    %636 = vmatpush1.msra.mxu0 0.0
    %637 = vmatprep.mubr.f32.mxu0 0.0
    %638 = vmatmul.mubr.f32.gmra.mrb[0].mxu0 %v568
    %v639 = vpop.f32.mrb[0].mxu0
    %v640 = vadd.f32 0.0, %v639
    %v641 = vpop.f32.mrb[0].mxu0
    %642 = vmatprep.mubr.f32.mxu0 0.0
    %643 = vmatmul.mubr.f32.gmra.mrb[0].mxu0 %v571
    %v644 = vpop.f32.mrb[0].mxu0
    %v645 = vadd.f32 0.0, %v644
    %v646 = vpop.f32.mrb[0].mxu0
    %647 = vdwg.mxu0
    %648 = vmatprep.subr.mxu0 0.0
    %649 = vmatpush1.msra.mxu0 %v640
    %650 = vmatprep.subr.mxu0 0.0
    %651 = vmatpush1.msra.mxu0 0.0
    %652 = vmatprep.subr.mxu0 0.0
    %653 = vmatpush1.msra.mxu0 0.0
    %654 = vmatprep.subr.mxu0 0.0
    %655 = vmatpush1.msra.mxu0 0.0
    %656 = vmatprep.subr.mxu0 0.0
    %657 = vmatpush1.msra.mxu0 0.0
    %658 = vmatprep.subr.mxu0 0.0
    %659 = vmatpush1.msra.mxu0 0.0
    %660 = vmatprep.subr.mxu0 0.0
    %661 = vmatpush1.msra.mxu0 0.0
    %662 = vmatprep.subr.mxu0 0.0
    %663 = vmatpush1.msra.mxu0 0.0
    %664 = vmatprep.subr.mxu0 0.0
    %665 = vmatpush1.msra.mxu0 0.0
    %666 = vmatprep.subr.mxu0 0.0
    %667 = vmatpush1.msra.mxu0 0.0
    %668 = vmatprep.subr.mxu0 0.0
    %669 = vmatpush1.msra.mxu0 0.0
    %670 = vmatprep.subr.mxu0 0.0
    %671 = vmatpush1.msra.mxu0 0.0
    %672 = vmatprep.subr.mxu0 0.0
    %673 = vmatpush1.msra.mxu0 0.0
    %674 = vmatprep.subr.mxu0 0.0
    %675 = vmatpush1.msra.mxu0 0.0
    %676 = vmatprep.subr.mxu0 0.0
    %677 = vmatpush1.msra.mxu0 0.0
    %678 = vmatprep.subr.mxu0 0.0
    %679 = vmatpush1.msra.mxu0 0.0
    %680 = vmatprep.subr.mxu0 0.0
    %681 = vmatpush1.msra.mxu0 0.0
    %682 = vmatprep.subr.mxu0 0.0
    %683 = vmatpush1.msra.mxu0 0.0
    %684 = vmatprep.subr.mxu0 0.0
    %685 = vmatpush1.msra.mxu0 0.0
    %686 = vmatprep.subr.mxu0 0.0
    %687 = vmatpush1.msra.mxu0 0.0
    %688 = vmatprep.subr.mxu0 0.0
    %689 = vmatpush1.msra.mxu0 0.0
    %690 = vmatprep.subr.mxu0 0.0
    %691 = vmatpush1.msra.mxu0 0.0
    %692 = vmatprep.subr.mxu0 0.0
    %693 = vmatpush1.msra.mxu0 0.0
    %694 = vmatprep.subr.mxu0 0.0
    %695 = vmatpush1.msra.mxu0 0.0
    %696 = vmatprep.subr.mxu0 0.0
    %697 = vmatpush1.msra.mxu0 0.0
    %698 = vmatprep.subr.mxu0 0.0
    %699 = vmatpush1.msra.mxu0 0.0
    %700 = vmatprep.subr.mxu0 0.0
    %701 = vmatpush1.msra.mxu0 0.0
    %702 = vmatprep.subr.mxu0 0.0
    %703 = vmatpush1.msra.mxu0 0.0
    %704 = vmatprep.subr.mxu0 0.0
    %705 = vmatpush1.msra.mxu0 0.0
    %706 = vmatprep.subr.mxu0 0.0
    %707 = vmatpush1.msra.mxu0 0.0
    %708 = vmatprep.subr.mxu0 0.0
    %709 = vmatpush1.msra.mxu0 0.0
    %710 = vmatprep.subr.mxu0 0.0
    %711 = vmatpush1.msra.mxu0 0.0
    %712 = vmatprep.mubr.f32.mxu0 0.0
    %713 = vmatmul.mubr.f32.gmra.mrb[0].mxu0 %v370
    %v714 = vpop.f32.mrb[0].mxu0
    %v715 = vadd.f32 0.0, %v714
    %v716 = vpop.f32.mrb[0].mxu0
    %717 = vdwg.mxu0
    %718 = vmatprep.subr.mxu0 0.0
    %719 = vmatpush1.msra.mxu0 %v645
    %720 = vmatprep.subr.mxu0 0.0
    %721 = vmatpush1.msra.mxu0 0.0
    %722 = vmatprep.subr.mxu0 0.0
    %723 = vmatpush1.msra.mxu0 0.0
    %724 = vmatprep.subr.mxu0 0.0
    %725 = vmatpush1.msra.mxu0 0.0
    %726 = vmatprep.subr.mxu0 0.0
    %727 = vmatpush1.msra.mxu0 0.0
    %728 = vmatprep.subr.mxu0 0.0
    %729 = vmatpush1.msra.mxu0 0.0
    %730 = vmatprep.subr.mxu0 0.0
    %731 = vmatpush1.msra.mxu0 0.0
    %732 = vmatprep.subr.mxu0 0.0
    %733 = vmatpush1.msra.mxu0 0.0
    %734 = vmatprep.subr.mxu0 0.0
    %735 = vmatpush1.msra.mxu0 0.0
    %736 = vmatprep.subr.mxu0 0.0
    %737 = vmatpush1.msra.mxu0 0.0
    %738 = vmatprep.subr.mxu0 0.0
    %739 = vmatpush1.msra.mxu0 0.0
    %740 = vmatprep.subr.mxu0 0.0
    %741 = vmatpush1.msra.mxu0 0.0
    %742 = vmatprep.subr.mxu0 0.0
    %743 = vmatpush1.msra.mxu0 0.0
    %744 = vmatprep.subr.mxu0 0.0
    %745 = vmatpush1.msra.mxu0 0.0
    %746 = vmatprep.subr.mxu0 0.0
    %747 = vmatpush1.msra.mxu0 0.0
    %748 = vmatprep.subr.mxu0 0.0
    %749 = vmatpush1.msra.mxu0 0.0
    %750 = vmatprep.subr.mxu0 0.0
    %751 = vmatpush1.msra.mxu0 0.0
    %752 = vmatprep.subr.mxu0 0.0
    %753 = vmatpush1.msra.mxu0 0.0
    %754 = vmatprep.subr.mxu0 0.0
    %755 = vmatpush1.msra.mxu0 0.0
    %756 = vmatprep.subr.mxu0 0.0
    %757 = vmatpush1.msra.mxu0 0.0
    %758 = vmatprep.subr.mxu0 0.0
    %759 = vmatpush1.msra.mxu0 0.0
    %760 = vmatprep.subr.mxu0 0.0
    %761 = vmatpush1.msra.mxu0 0.0
    %762 = vmatprep.subr.mxu0 0.0
    %763 = vmatpush1.msra.mxu0 0.0
    %764 = vmatprep.subr.mxu0 0.0
    %765 = vmatpush1.msra.mxu0 0.0
    %766 = vmatprep.subr.mxu0 0.0
    %767 = vmatpush1.msra.mxu0 0.0
    %768 = vmatprep.subr.mxu0 0.0
    %769 = vmatpush1.msra.mxu0 0.0
    %770 = vmatprep.subr.mxu0 0.0
    %771 = vmatpush1.msra.mxu0 0.0
    %772 = vmatprep.subr.mxu0 0.0
    %773 = vmatpush1.msra.mxu0 0.0
    %774 = vmatprep.subr.mxu0 0.0
    %775 = vmatpush1.msra.mxu0 0.0
    %776 = vmatprep.subr.mxu0 0.0
    %777 = vmatpush1.msra.mxu0 0.0
    %778 = vmatprep.subr.mxu0 0.0
    %779 = vmatpush1.msra.mxu0 0.0
    %780 = vmatprep.subr.mxu0 0.0
    %781 = vmatpush1.msra.mxu0 0.0
    %782 = vmatprep.mubr.f32.mxu0 0.0
    %783 = vmatmul.mubr.f32.gmra.mrb[0].mxu0 %v443
    %v784 = vpop.f32.mrb[0].mxu0
    %v785 = vadd.f32 0.0, %v784
    %v786 = vpop.f32.mrb[0].mxu0
    %787 = vdwg.mxu0
    %v788 = vsel %vm37, %v715, 0.0
    %789 = vadd.xlane.f32.xlu0 %v788
    %v790 = vpop.xlane.xlu0 %789
    %v791 = vsel %vm37, %v785, 0.0
    %792 = vadd.xlane.f32.xlu0 %v791
    %v793 = vpop.xlane.xlu0 %792
    %v794 = vmul.f32 %v790, %v521
    %v795 = vmul.f32 %v793, %v521
    %v796 = vmul.f32 %v715, %v715
    %v797 = vmul.f32 %v785, %v785
    %v798 = vsel %vm37, %v796, 0.0
    %799 = vadd.xlane.f32.xlu0 %v798
    %v800 = vpop.xlane.xlu0 %799
    %v801 = vsel %vm37, %v797, 0.0
    %802 = vadd.xlane.f32.xlu0 %v801
    %v803 = vpop.xlane.xlu0 %802
    %v804 = vmul.f32 %v800, %v521
    %v805 = vmul.f32 %v803, %v521
    %v806 = vmul.f32 %v794, %v794
    %v807 = vmul.f32 %v795, %v795
    %v808 = vsub.f32 %v804, %v806
    %v809 = vsub.f32 %v805, %v807
    %v810 = vsub.f32 %v715, %v794
    %v811 = vsub.f32 %v785, %v795
    %v812 = vadd.f32 %v808, 1e-05
    %v813 = vadd.f32 %v809, 1e-05
    %v814 = vrsqrt.pop %v812
    %v815 = vrsqrt.pop %v813
    %v816 = vmul.f32 %v810, %v814
    %v817 = vmul.f32 %v811, %v815
    %v818 = vld [vmem:[%s4 + $0x1] sm:$0x1]
    %v819 = vlaneseq
    %v820 = vshrl.u32 %v819, 7
    %v821 = vsub.s32 0, %v820
    %v822 = vrot.slane %v818, %v821
    %v823 = vmul.f32 %v816, %v822
    %v824 = vmul.f32 %v817, %v822
    %v825 = vld [vmem:[%s5 + $0x1] sm:$0x1]
    %v826 = vlaneseq
    %v827 = vshrl.u32 %v826, 7
    %v828 = vsub.s32 0, %v827
    %v829 = vrot.slane %v825, %v828
    %v830 = vadd.f32 %v823, %v829
    %v831 = vadd.f32 %v824, %v829
    %v832 = vmax.f32 %v830, 0.0
    %v833 = vmax.f32 %v831, 0.0
    %v834 = vsel %vm37, %v832, 0.0
    %v835 = vrot.slane %v834, 4
    %v836 = vadd.f32 %v834, %v835
    %v837 = vrot.slane %v836, 2
    %v838 = vadd.f32 %v836, %v837
    %v839 = vrot.slane %v838, 1
    %v840 = vadd.f32 %v838, %v839
    %v841 = vsel %vm37, %v833, 0.0
    %v842 = vrot.slane %v841, 4
    %v843 = vadd.f32 %v841, %v842
    %v844 = vrot.slane %v843, 2
    %v845 = vadd.f32 %v843, %v844
    %v846 = vrot.slane %v845, 1
    %v847 = vadd.f32 %v845, %v846
    %v848 = vrcp.pop 8.0
    %v849 = vmul.f32 %v840, %v848
    %v850 = vmul.f32 %v847, %v848
    %vm853 = vcmask 1041409
    %v854 = vsel %vm853, %v850, %v849
    %vm856 = vcmask 254976
    %857 = vst.msk [vmem:[#allocation2] sm:$0x3] %vm856, %v854
    // Predicated region
    $region26: #{graph_module.1} parent=1 // pred_check
      _
    $region27: #{graph_module.1} parent=1 // pred_check_branch
      %859 = sbr.rel (0) target = $region29
    $region28: #{graph_module.1} parent=1 // pred_region
      %s861 = ssub.s32 32, 32
      %862 = vsyncadd [#allocation3], %s861
      %s864 = sshll.u32 [#allocation2], 4
      %s865 = int_to_ptr.vmem [resolvable:$true] %s864
      %867 = dma.vmem_to_hbm [thread:$0]  %s865, 32, %s6, [#allocation3]
    $region29: #{graph_module.1} parent=1 // pred_fallthru
      _
    // Predicated region
    $region30: #{graph_module.1} parent=1 // pred_check
      _
    $region31: #{graph_module.1} parent=1 // pred_check_branch
      %869 = sbr.rel (0) target = $region33
    $region32: #{graph_module.1} parent=1 // pred_region
      %870 = dma.done [#allocation3], 32
    $region33: #{graph_module.1} parent=1 // pred_fallthru
      _
    %871 = vsyncpa [#allocation3], 1

</llo_original>
